<compile_context>
chip_gen: v5e
topology: v5e:2x2
jax: 0.10.0
libtpu: 0.0.40
codegen_flags: <defaults>
</compile_context>

<pallas_src>
import math

import jax
import jax.numpy as jnp
from jax import lax
from jax.experimental import pallas as pl
from jax.experimental.pallas import tpu as pltpu

_LANE = 128    # last block dim must be a multiple of this (or the full dim)
_SUBLANE = 8   # second-to-last block dim multiple for f32


def _cdiv(a, b):
    return (a + b - 1) // b


def _round_up(a, m):
    return _cdiv(a, m) * m


def _balanced(total, max_tile, mult):
    """`total` itself if it fits, else a balanced tile (multiple of `mult`)
    so the last tile is not nearly empty (avoids masked partial stores)."""
    if total <= max_tile:
        return total
    return _round_up(_cdiv(total, _cdiv(total, max_tile)), mult)


def _vmem_capacity_bytes():
    """Per-TensorCore VMEM capacity; falls back to 64 MiB (v7x, the smallest
    current generation) if the query is unavailable."""
    try:
        cap = int(pltpu.get_tpu_info().vmem_capacity_bytes)
        if cap > 0:
            return cap
    except Exception:
        pass
    return 64 * 1024 * 1024


# ----------------------------------------------------------------------------
# Kernels
# ----------------------------------------------------------------------------
def _make_general_kernel(pb, tk, k_total, mask_k):
    """out[p] = W @ x[p] + b for `pb` p-slices per grid step.

    Grid = (p, n, q, k); k is the reduction axis, accumulated in f32 scratch.
    Block shapes: x (pb, tk, tq), W (tn, tk), bias (tn, 1), out (pb, tn, tq).
    """

    def kernel(x_ref, w_ref, b_ref, o_ref, acc_ref):
        k = pl.program_id(3)

        @pl.when(k == 0)
        def _():
            acc_ref[...] = jnp.zeros_like(acc_ref)

        w = w_ref[...]                                        # (tn, tk)
        if mask_k:
            # Ragged K tail: zero *both* operands' out-of-bounds region so
            # stale VMEM garbage (possibly NaN/Inf) cannot enter the sum.
            base = k * tk
            w_off = base + lax.broadcasted_iota(jnp.int32, w.shape, 1)
            w = jnp.where(w_off < k_total, w, jnp.zeros_like(w))

        for p in range(pb):                                   # static unroll
            xp = x_ref[p, :, :]                               # (tk, tq)
            if mask_k:
                x_off = k * tk + lax.broadcasted_iota(jnp.int32, xp.shape, 0)
                xp = jnp.where(x_off < k_total, xp, jnp.zeros_like(xp))
            acc_ref[p, :, :] += jnp.dot(w, xp,
                                        preferred_element_type=jnp.float32)

        @pl.when(k == pl.num_programs(3) - 1)
        def _():
            bias = b_ref[...]                                 # (tn, 1) f32
            o_ref[...] = (acc_ref[...] + bias[None, :, :]).astype(o_ref.dtype)

    return kernel


def _make_lastdim_kernel(tk, k_total, mask_k):
    """out = x @ W^T + b with the output feature axis on lanes.

    Grid = (m, n, k); k is the reduction axis.  W stays (tn, tk): the
    contraction orientation is handled by dot_general on the MXU (no
    wrapper-side weight transpose / extra HBM pass).
    """
    dnums = (((1,), (1,)), ((), ()))   # contract x dim 1 with W dim 1

    def kernel(x_ref, w_ref, b_ref, o_ref, acc_ref):
        k = pl.program_id(2)

        @pl.when(k == 0)
        def _():
            acc_ref[...] = jnp.zeros_like(acc_ref)

        xt = x_ref[...]                                       # (tm, tk)
        w = w_ref[...]                                        # (tn, tk)
        if mask_k:
            base = k * tk
            x_off = base + lax.broadcasted_iota(jnp.int32, xt.shape, 1)
            w_off = base + lax.broadcasted_iota(jnp.int32, w.shape, 1)
            xt = jnp.where(x_off < k_total, xt, jnp.zeros_like(xt))
            w = jnp.where(w_off < k_total, w, jnp.zeros_like(w))

        acc_ref[...] += lax.dot_general(
            xt, w, dimension_numbers=dnums,
            preferred_element_type=jnp.float32)               # (tm, tn)

        @pl.when(k == pl.num_programs(2) - 1)
        def _():
            o_ref[...] = (acc_ref[...] + b_ref[...]).astype(o_ref.dtype)

    return kernel


# ----------------------------------------------------------------------------
# Tile selection (VMEM-budget aware)
# ----------------------------------------------------------------------------
def _fit_general(P, K, N, Q, x_isz, w_isz, o_isz, budget,
                 tq_max, tk_max, tn_max, pb_max):
    tq = _balanced(Q, tq_max, _LANE)
    tk = _balanced(K, tk_max, _LANE)
    tn = _balanced(N, tn_max, _SUBLANE)
    pb = 1

    def fp(pb, tn, tk, tq):
        return (2 * pb * tk * tq * x_isz      # x blocks   (double-buffered)
                + 2 * pb * tn * tq * o_isz    # out blocks (double-buffered)
                + 2 * tn * tk * w_isz         # weight blocks
                + 2 * tn * 4                  # bias blocks
                + pb * tn * tq * 4)           # f32 accumulator scratch

    # Shrink the largest tiled dim until the footprint fits the VMEM budget.
    for _ in range(64):
        if fp(pb, tn, tk, tq) <= budget:
            break
        shrunk = False
        for name, cur, mult in sorted(
                [("tk", tk, _LANE), ("tn", tn, _SUBLANE), ("tq", tq, _LANE)],
                key=lambda c: -c[1]):
            if cur > mult:
                new = max(mult, _round_up(_cdiv(cur, 2), mult))
                if new < cur:
                    if name == "tk":
                        tk = new
                    elif name == "tn":
                        tn = new
                    else:
                        tq = new
                    shrunk = True
                    break
        if not shrunk:
            break

    # Tiny K*N (channel projections): block several p-slices per grid step so
    # each step moves ~>= 2 MiB, amortizing the per-step pipeline overhead.
    step_bytes = tk * tq * x_isz + tn * tq * o_isz
    target = 2 << 20
    if P > 1 and step_bytes < target:
        pb = max(1, min(P, pb_max, target // max(step_bytes, 1)))
        while pb > 1 and fp(pb, tn, tk, tq) > budget:
            pb -= 1

    # Guarantee >= 2 steps on a parallel grid axis (v7x has 2 TensorCores).
    if _cdiv(P, pb) * _cdiv(N, tn) * _cdiv(Q, tq) < 2:
        if P >= 2:
            pb = _cdiv(P, 2)
        elif Q >= 2 * _LANE:
            tq = _round_up(_cdiv(Q, 2), _LANE)
        elif N >= 2 * _SUBLANE:
            tn = _round_up(_cdiv(N, 2), _SUBLANE)

    return pb, tn, tk, tq, fp(pb, tn, tk, tq)


def _fit_lastdim(M, K, N, x_isz, w_isz, o_isz, budget, tm_max, tk_max, tn_max):
    tm = _balanced(M, tm_max, _SUBLANE)
    tk = _balanced(K, tk_max, _LANE)
    tn = _balanced(N, tn_max, _LANE)     # output lane dim -> 128 multiple

    def fp(tm, tn, tk):
        return (2 * tm * tk * x_isz
                + 2 * tn * tk * w_isz
                + 2 * tm * tn * o_isz
                + 2 * tn * 4
                + tm * tn * 4)

    for _ in range(64):
        if fp(tm, tn, tk) <= budget:
            break
        shrunk = False
        for name, cur, mult in sorted(
                [("tk", tk, _LANE), ("tn", tn, _LANE), ("tm", tm, _SUBLANE)],
                key=lambda c: -c[1]):
            if cur > mult:
                new = max(mult, _round_up(_cdiv(cur, 2), mult))
                if new < cur:
                    if name == "tk":
                        tk = new
                    elif name == "tn":
                        tn = new
                    else:
                        tm = new
                    shrunk = True
                    break
        if not shrunk:
            break

    # >= 2 parallel grid steps for v7x's two TensorCores when possible.
    if _cdiv(M, tm) * _cdiv(N, tn) < 2:
        if M >= 2 * _SUBLANE:
            tm = _round_up(_cdiv(M, 2), _SUBLANE)
        elif N >= 2 * _LANE:
            tn = _round_up(_cdiv(N, 2), _LANE)

    return tm, tn, tk, fp(tm, tn, tk)


# ----------------------------------------------------------------------------
# Public wrapper
# ----------------------------------------------------------------------------
def omni_proj(x, weight, bias, dim, *,
              tq_max=1024, tk_max=1024, tn_max=1024, tm_max=1024, pb_max=256):
    """y = Linear(x) applied along axis `dim` (matches OmniProj.forward).

    The axis of size input_dim at position `dim` becomes output_dim.
    weight: (output_dim, input_dim), bias: (output_dim,)  -- nn.Linear layout.
    """
    if dim < 0:
        raise ValueError("dim must be a non-negative integer")
    if dim >= x.ndim:
        raise ValueError(
            f"dim must be less than the number of dimensions of the input "
            f"tensor, got {dim} for tensor with shape {x.shape}")
    N, K = weight.shape
    if x.shape[dim] != K:
        raise ValueError(
            f"x.shape[{dim}]={x.shape[dim]} does not match input_dim={K}")

    lead = x.shape[:dim]
    trail = x.shape[dim + 1:]
    P = int(math.prod(lead)) if lead else 1
    Q = int(math.prod(trail)) if trail else 1

    bias_f32 = bias.astype(jnp.float32)
    x_isz = jnp.dtype(x.dtype).itemsize
    w_isz = jnp.dtype(weight.dtype).itemsize
    o_isz = x_isz
    cap = _vmem_capacity_bytes()
    budget = (cap * 3) // 4      # leave headroom for compiler scratch

    if Q == 1:
        # `dim` is (effectively) the last axis: out2d = x2d @ W^T + b with the
        # output feature axis on lanes.  W is passed as (N, K); the contraction
        # is done natively by the MXU inside the kernel (no wrapper weight.T).
        M = P
        x2d = x.reshape(M, K)
        tm, tn, tk, foot = _fit_lastdim(M, K, N, x_isz, w_isz, o_isz, budget,
                                        tm_max, tk_max, tn_max)
        mask_k = (tk < K) and (K % tk != 0)
        grid = (_cdiv(M, tm), _cdiv(N, tn), _cdiv(K, tk))
        vmem_limit = int(min(cap * 15 // 16, max(foot + (8 << 20), 32 << 20)))

        out2d = pl.pallas_call(
            _make_lastdim_kernel(tk, K, mask_k),
            out_shape=jax.ShapeDtypeStruct((M, N), x.dtype),
            grid_spec=pltpu.PrefetchScalarGridSpec(
                num_scalar_prefetch=0,
                grid=grid,
                in_specs=[
                    pl.BlockSpec((tm, tk), lambda m, n, k: (m, k)),   # x tile
                    pl.BlockSpec((tn, tk), lambda m, n, k: (n, k)),   # W tile
                    pl.BlockSpec((1, tn), lambda m, n, k: (0, n)),    # bias
                ],
                out_specs=pl.BlockSpec((tm, tn), lambda m, n, k: (m, n)),
                scratch_shapes=[pltpu.VMEM((tm, tn), jnp.float32)],
            ),
            compiler_params=pltpu.CompilerParams(
                dimension_semantics=("parallel", "parallel", "arbitrary"),
                vmem_limit_bytes=vmem_limit),
        )(x2d, weight, bias_f32.reshape(1, N))
        return out2d.reshape(*lead, N, *trail)

    # General case: view x as (P, K, Q) -- pure reshape, no data movement.
    # Trailing (post-`dim`) axes stay contiguous on the lane axis of both the
    # input and the output blocks.
    x3d = x.reshape(P, K, Q)
    pb, tn, tk, tq, foot = _fit_general(P, K, N, Q, x_isz, w_isz, o_isz,
                                        budget, tq_max, tk_max, tn_max, pb_max)
    mask_k = (tk < K) and (K % tk != 0)
    grid = (_cdiv(P, pb), _cdiv(N, tn), _cdiv(Q, tq), _cdiv(K, tk))
    vmem_limit = int(min(cap * 15 // 16, max(foot + (8 << 20), 32 << 20)))

    out3d = pl.pallas_call(
        _make_general_kernel(pb, tk, K, mask_k),
        out_shape=jax.ShapeDtypeStruct((P, N, Q), x.dtype),
        grid_spec=pltpu.PrefetchScalarGridSpec(
            num_scalar_prefetch=0,
            grid=grid,
            in_specs=[
                pl.BlockSpec((pb, tk, tq), lambda p, n, q, k: (p, k, q)),
                # W block index is constant across p and q -> weight-stationary.
                pl.BlockSpec((tn, tk), lambda p, n, q, k: (n, k)),
                pl.BlockSpec((tn, 1), lambda p, n, q, k: (n, 0)),
            ],
            out_specs=pl.BlockSpec((pb, tn, tq), lambda p, n, q, k: (p, n, q)),
            scratch_shapes=[pltpu.VMEM((pb, tn, tq), jnp.float32)],
        ),
        compiler_params=pltpu.CompilerParams(
            dimension_semantics=("parallel", "parallel", "parallel",
                                 "arbitrary"),
            vmem_limit_bytes=vmem_limit),
    )(x3d, weight, bias_f32.reshape(N, 1))

    # Pure reshape back -- `dim`'s position is preserved, no transpose.
    return out3d.reshape(*lead, N, *trail)


# ----------------------------------------------------------------------------
# Demo / correctness checks
# ----------------------------------------------------------------------------
if __name__ == "__main__":
    # Matches OmniProj(input_dim=4, output_dim=10, dim=1) on x of shape
    # (2, 4, 16, 16)  (NCHW-style input; project the channel dim).
    input_dim, output_dim, dim = 4, 10, 1
    x_shape = (2, 4, 16, 16)

    key = jax.random.PRNGKey(0)
    kx, kw, kb, kx2, kx3, kw3, kb3 = jax.random.split(key, 7)

    x = jax.random.normal(kx, x_shape, dtype=jnp.float32)
    bound = 1.0 / math.sqrt(input_dim)
    weight = jax.random.uniform(kw, (output_dim, input_dim),
                                minval=-bound, maxval=bound, dtype=jnp.float32)
    bias = jax.random.uniform(kb, (output_dim,),
                              minval=-bound, maxval=bound, dtype=jnp.float32)

    def ref(x, w, b, d):
        return jnp.moveaxis(jnp.moveaxis(x, d, -1) @ w.T + b, -1, d)

    # 1) Main lane-dense, transpose-free path (dim != last axis).
    y = jax.block_until_ready(omni_proj(x, weight, bias, dim))
    assert y.shape == (2, output_dim, 16, 16), y.shape
    assert jnp.allclose(y, ref(x, weight, bias, dim), atol=1e-5, rtol=1e-5)

    # 2) `dim == last axis` path (no wrapper-side weight transpose).
    x2 = jax.random.normal(kx2, (8, 16, input_dim), dtype=jnp.float32)
    y2 = jax.block_until_ready(omni_proj(x2, weight, bias, dim=2))
    assert y2.shape == (8, 16, output_dim), y2.shape
    assert jnp.allclose(y2, x2 @ weight.T + bias, atol=1e-5, rtol=1e-5)

    # 3) Exercise K-reduction (ragged, in-kernel masked), N tiling and
    #    multi-p blocking by forcing small tile caps.
    K3, N3 = 200, 20
    x3 = jax.random.normal(kx3, (3, K3, 2, 72), dtype=jnp.float32)
    b3nd = 1.0 / math.sqrt(K3)
    w3 = jax.random.uniform(kw3, (N3, K3), minval=-b3nd, maxval=b3nd,
                            dtype=jnp.float32)
    b3 = jax.random.uniform(kb3, (N3,), minval=-b3nd, maxval=b3nd,
                            dtype=jnp.float32)
    y3 = jax.block_until_ready(
        omni_proj(x3, w3, b3, dim=1, tk_max=128, tn_max=8, tq_max=128))
    assert y3.shape == (3, N3, 2, 72), y3.shape
    assert jnp.allclose(y3, ref(x3, w3, b3, 1), atol=1e-2, rtol=1e-2)

    print("KERNEL_OK")
</pallas_src>

<mosaic_0001>
module attributes {stable_mosaic.version = 11 : i64} {
  func.func @kernel(%arg0: i32, %arg1: i32, %arg2: i32, %arg3: i32, %arg4: memref<1x4x256xf32, #tpu.memory_space<vmem>>, %arg5: memref<10x4xf32, #tpu.memory_space<vmem>>, %arg6: memref<10x1xf32, #tpu.memory_space<vmem>>, %arg7: memref<1x10x256xf32, #tpu.memory_space<vmem>>, %arg8: memref<1x10x256xf32, #tpu.memory_space<vmem>>) attributes {dimension_semantics = [#tpu.dimension_semantics<parallel>, #tpu.dimension_semantics<parallel>, #tpu.dimension_semantics<parallel>, #tpu.dimension_semantics<arbitrary>], iteration_bounds = array<i64: 2, 1, 1, 1>, scalar_prefetch = 0 : i64, scratch_operands = 1 : i64, tpu.core_type = #tpu.core_type<tc>, window_params = [{transform_indices = @transform_0, window_bounds = array<i64: 1, 4, 256>}, {transform_indices = @transform_1, window_bounds = array<i64: 10, 4>}, {transform_indices = @transform_2, window_bounds = array<i64: 10, 1>}, {transform_indices = @transform_3, window_bounds = array<i64: 1, 10, 256>}]} {
    %c0_i32 = arith.constant 0 : i32
    %0 = arith.cmpi eq, %arg3, %c0_i32 : i32
    %1 = arith.extui %0 : i1 to i32
    %c0_i32_0 = arith.constant 0 : i32
    %2 = arith.cmpi ne, %1, %c0_i32_0 : i32
    scf.if %2 {
      %cst_13 = arith.constant 0.000000e+00 : f32
      %16 = vector.broadcast %cst_13 : f32 to vector<1x10x256xf32>
      %c0_14 = arith.constant 0 : index
      %c0_15 = arith.constant 0 : index
      %c0_16 = arith.constant 0 : index
      %17 = vector.load %arg8[%c0_14, %c0_15, %c0_16] : memref<1x10x256xf32, #tpu.memory_space<vmem>>, vector<1x10x256xf32>
      tpu.vector_store %arg8[%c0_14, %c0_15, %c0_16], %16 {strides = array<i32>} : memref<1x10x256xf32, #tpu.memory_space<vmem>>, vector<1x10x256xf32>,
    } else {
    }
    %c0 = arith.constant 0 : index
    %c0_1 = arith.constant 0 : index
    %3 = vector.load %arg5[%c0, %c0_1] : memref<10x4xf32, #tpu.memory_space<vmem>>, vector<10x4xf32>
    %c0_2 = arith.constant 0 : index
    %c0_3 = arith.constant 0 : index
    %c0_4 = arith.constant 0 : index
    %4 = vector.load %arg4[%c0_2, %c0_3, %c0_4] : memref<1x4x256xf32, #tpu.memory_space<vmem>>, vector<1x4x256xf32>
    %5 = vector.shape_cast %4 : vector<1x4x256xf32> to vector<4x256xf32>
    %c0_5 = arith.constant 0 : index
    %c0_6 = arith.constant 0 : index
    %c0_7 = arith.constant 0 : index
    %6 = vector.load %arg8[%c0_5, %c0_6, %c0_7] : memref<1x10x256xf32, #tpu.memory_space<vmem>>, vector<1x10x256xf32>
    %7 = vector.shape_cast %6 : vector<1x10x256xf32> to vector<10x256xf32>
    %cst = arith.constant dense<0.000000e+00> : vector<10x256xf32>
    %8 = tpu.matmul %3, %5, %cst {dimension_numbers = #tpu.dot_dimension_numbers<[1], [0], [0], [1], [0, 0, 1, 1], [], []>} : vector<10x4xf32>, vector<4x256xf32>, vector<10x256xf32> -> vector<10x256xf32>
    %9 = arith.addf %7, %8 : vector<10x256xf32>
    %c0_8 = arith.constant 0 : index
    %c0_9 = arith.constant 0 : index
    %c0_10 = arith.constant 0 : index
    %10 = vector.load %arg8[%c0_8, %c0_9, %c0_10] : memref<1x10x256xf32, #tpu.memory_space<vmem>>, vector<1x10x256xf32>
    %11 = vector.shape_cast %10 : vector<1x10x256xf32> to vector<10x256xf32>
    %12 = vector.shape_cast %9 : vector<10x256xf32> to vector<1x10x256xf32>
    tpu.vector_store %arg8[%c0_8, %c0_9, %c0_10], %12 {strides = array<i32>} : memref<1x10x256xf32, #tpu.memory_space<vmem>>, vector<1x10x256xf32>,
    %c0_i32_11 = arith.constant 0 : i32
    %13 = arith.cmpi eq, %arg3, %c0_i32_11 : i32
    %14 = arith.extui %13 : i1 to i32
    %c0_i32_12 = arith.constant 0 : i32
    %15 = arith.cmpi ne, %14, %c0_i32_12 : i32
    scf.if %15 {
      %c0_13 = arith.constant 0 : index
      %c0_14 = arith.constant 0 : index
      %16 = vector.load %arg6[%c0_13, %c0_14] : memref<10x1xf32, #tpu.memory_space<vmem>>, vector<10x1xf32>
      %c0_15 = arith.constant 0 : index
      %c0_16 = arith.constant 0 : index
      %c0_17 = arith.constant 0 : index
      %17 = vector.load %arg8[%c0_15, %c0_16, %c0_17] : memref<1x10x256xf32, #tpu.memory_space<vmem>>, vector<1x10x256xf32>
      %18 = vector.shape_cast %16 : vector<10x1xf32> to vector<1x10x1xf32>
      %19 = vector.broadcast %18 : vector<1x10x1xf32> to vector<1x10x256xf32>
      %20 = arith.addf %17, %19 : vector<1x10x256xf32>
      %c0_18 = arith.constant 0 : index
      %c0_19 = arith.constant 0 : index
      %c0_20 = arith.constant 0 : index
      %21 = vector.load %arg7[%c0_18, %c0_19, %c0_20] : memref<1x10x256xf32, #tpu.memory_space<vmem>>, vector<1x10x256xf32>
      tpu.vector_store %arg7[%c0_18, %c0_19, %c0_20], %20 {strides = array<i32>} : memref<1x10x256xf32, #tpu.memory_space<vmem>>, vector<1x10x256xf32>,
    } else {
    }
    return
  }
  func.func @transform_0(%arg0: i32, %arg1: i32, %arg2: i32, %arg3: i32) -> (i32, i32, i32) {
    %c0_i32 = arith.constant 0 : i32
    return %arg0, %arg3, %arg2 : i32, i32, i32
  }
  func.func @transform_1(%arg0: i32, %arg1: i32, %arg2: i32, %arg3: i32) -> (i32, i32) {
    %c0_i32 = arith.constant 0 : i32
    return %arg1, %arg3 : i32, i32
  }
  func.func @transform_2(%arg0: i32, %arg1: i32, %arg2: i32, %arg3: i32) -> (i32, i32) {
    %c0_i32 = arith.constant 0 : i32
    %c0_i32_0 = arith.constant 0 : i32
    return %arg1, %c0_i32 : i32, i32
  }
  func.func @transform_3(%arg0: i32, %arg1: i32, %arg2: i32, %arg3: i32) -> (i32, i32, i32) {
    %c0_i32 = arith.constant 0 : i32
    return %arg0, %arg1, %arg2 : i32, i32, i32
  }
}

</mosaic_0001>

<llo_original>
// kernel: tpu_custom_call.1
$region0: #{tpu_custom_call.1}
  #allocation0 [shape = 'u32[]', space=smem, size = 0x4, offset = 0x4, fixed_abs, tag = 'smem constant byte address 0x4 - core index']
  #allocation1 [shape = 'u32[72,128]{1,0:T(1,128)}', space=vmem, size = 0x9000, scoped, tag = 'internal scratch']
  #allocation2 [shape = 'f32[1,10,256]{2,1,0:T(8,128)}', space=vmem, size = 0x4000, scoped, tag = 'scratch operand']
  %s0 = inlined_call_operand.vmem [shape: f32[2,4,256], index: 0, kind: input, shape index: {}]
  %s1 = inlined_call_operand.vmem [shape: f32[10,4], index: 1, kind: input, shape index: {}]
  %s2 = inlined_call_operand.vmem [shape: f32[10,1], index: 2, kind: input, shape index: {}]
  %s3 = inlined_call_operand.vmem [shape: f32[2,10,256], index: 3, kind: output, shape index: {}]
  %s4 = sld [smem:[#allocation0]]
  $region53: #{tpu_custom_call.1} parent=0
    _
  %s6 = ssub.s32 1, %s4
  %s7 = scalar_select 0, %s6, %s4
  loop: start=0, step=1, limit=4
  $region2: #{tpu_custom_call.1} parent=0 // loop_pre_header
    _
  $region3: #{tpu_custom_call.1} parent=0 // loop_header
    %s9 = sphi 0, %s13
    %p10 = scmp.ge.s32.totalorder %s9, 4
    %s16 = sphi 0, %s42
    %s17 = sphi 0, %s38
    %s18 = sphi 0, %s34
    %s19 = sphi 0, %s30
    %s20 = sphi 0, %s16
    %s21 = sphi 0, %s17
    %s22 = sphi 0, %s18
    %s23 = sphi 0, %s19
    %s24 = sphi 0, %s20
    %s25 = sphi 0, %s21
    %s26 = sphi 0, %s22
    %s27 = sphi 0, %s23
    %s49 = sphi 0, %s51
    %s52 = sphi 0, %s49
    %s53 = sphi 0, %s52
    %s69 = sphi 0, %s53
    %s77 = sphi 0, %s79
    %s80 = sphi 0, %s77
    %s81 = sphi 0, %s80
    %s97 = sphi 0, %s81
    %s103 = sphi 0, %s105
    %s106 = sphi 0, %s103
    %s107 = sphi 0, %s106
    %s123 = sphi 0, %s107
    %s133 = sphi 0, %s135
    %s136 = sphi 0, %s133
    %s137 = sphi 0, %s136
    %s153 = sphi 0, %s137
  $region4: #{tpu_custom_call.1} parent=0 // loop_header_branch
    %12 = sbr.rel (%p10) target = $region8
  $region5: #{tpu_custom_call.1} parent=0 // loop_body
    %s14 = ssub.s32 %s9, 1
    %s15 = ssub.s32 %s9, 2
    %s28 = sadd.s32 1, %s19
    %p29 = scmp.ge.s32.totalorder %s28, 1
    %s30 = scalar_select %p29, 0, %s28
    %s31 = sadd.s32 1, %s18
    %s32 = scalar_select %p29, %s31, %s18
    %p33 = scmp.ge.s32.totalorder %s32, 1
    %s34 = scalar_select %p33, 0, %s32
    %s35 = sadd.s32 1, %s17
    %s36 = scalar_select %p33, %s35, %s17
    %p37 = scmp.ge.s32.totalorder %s36, 1
    %s38 = scalar_select %p37, 0, %s36
    %s39 = sadd.s32 1, %s16
    %s40 = scalar_select %p37, %s39, %s16
    %p41 = scmp.ge.s32.totalorder %s40, 2
    %s42 = scalar_select %p41, 0, %s40
    %s43 = ssub.s32 %s16, %s42
    %s44 = ssub.s32 %s19, %s30
    %s45 = sor.u32 %s43, %s44
    %s46 = ssub.s32 %s18, %s34
    %s47 = sor.u32 %s45, %s46
    %p48 = scmp.eq.s32.totalorder %s47, 0
    %s50 = sadd.s32 %s49, 1
    %s51 = scalar_select %p48, %s49, %s50
    %p54 = pneg %p48
    %p55 = scmp.eq.s32.totalorder %s9, 1
    %p56 = por %p54, %p55
    %p57 = scmp.ne.s32.totalorder %s49, %s52
    %p58 = scmp.eq.s32.totalorder %s9, 0
    %p59 = por %p57, %p58
    %p60 = scmp.ne.s32.totalorder %s49, %s52
    %p61 = scmp.eq.s32.totalorder %s14, 1
    %p62 = por %p60, %p61
    %p63 = scmp.ne.s32.totalorder %s52, %s53
    %p64 = scmp.eq.s32.totalorder %s14, 0
    %p65 = por %p63, %p64
    %p66 = scmp.ne.s32.totalorder %s52, %s53
    %p67 = scmp.eq.s32.totalorder %s15, 1
    %p68 = por %p66, %p67
    %p70 = scmp.ne.s32.totalorder %s53, %s69
    %p71 = scmp.eq.s32.totalorder %s15, 0
    %p72 = por %p70, %p71
    %s73 = ssub.s32 %s17, %s38
    %s74 = ssub.s32 %s19, %s30
    %s75 = sor.u32 %s73, %s74
    %p76 = scmp.eq.s32.totalorder %s75, 0
    %s78 = sadd.s32 %s77, 1
    %s79 = scalar_select %p76, %s77, %s78
    %p82 = pneg %p76
    %p83 = scmp.eq.s32.totalorder %s9, 1
    %p84 = por %p82, %p83
    %p85 = scmp.ne.s32.totalorder %s77, %s80
    %p86 = scmp.eq.s32.totalorder %s9, 0
    %p87 = por %p85, %p86
    %p88 = scmp.ne.s32.totalorder %s77, %s80
    %p89 = scmp.eq.s32.totalorder %s14, 1
    %p90 = por %p88, %p89
    %p91 = scmp.ne.s32.totalorder %s80, %s81
    %p92 = scmp.eq.s32.totalorder %s14, 0
    %p93 = por %p91, %p92
    %p94 = scmp.ne.s32.totalorder %s80, %s81
    %p95 = scmp.eq.s32.totalorder %s15, 1
    %p96 = por %p94, %p95
    %p98 = scmp.ne.s32.totalorder %s81, %s97
    %p99 = scmp.eq.s32.totalorder %s15, 0
    %p100 = por %p98, %p99
    %s101 = ssub.s32 %s17, %s38
    %p102 = scmp.eq.s32.totalorder %s101, 0
    %s104 = sadd.s32 %s103, 1
    %s105 = scalar_select %p102, %s103, %s104
    %p108 = pneg %p102
    %p109 = scmp.eq.s32.totalorder %s9, 1
    %p110 = por %p108, %p109
    %p111 = scmp.ne.s32.totalorder %s103, %s106
    %p112 = scmp.eq.s32.totalorder %s9, 0
    %p113 = por %p111, %p112
    %p114 = scmp.ne.s32.totalorder %s103, %s106
    %p115 = scmp.eq.s32.totalorder %s14, 1
    %p116 = por %p114, %p115
    %p117 = scmp.ne.s32.totalorder %s106, %s107
    %p118 = scmp.eq.s32.totalorder %s14, 0
    %p119 = por %p117, %p118
    %p120 = scmp.ne.s32.totalorder %s106, %s107
    %p121 = scmp.eq.s32.totalorder %s15, 1
    %p122 = por %p120, %p121
    %p124 = scmp.ne.s32.totalorder %s107, %s123
    %p125 = scmp.eq.s32.totalorder %s15, 0
    %p126 = por %p124, %p125
    %s127 = ssub.s32 %s16, %s42
    %s128 = ssub.s32 %s17, %s38
    %s129 = sor.u32 %s127, %s128
    %s130 = ssub.s32 %s18, %s34
    %s131 = sor.u32 %s129, %s130
    %p132 = scmp.eq.s32.totalorder %s131, 0
    %s134 = sadd.s32 %s133, 1
    %s135 = scalar_select %p132, %s133, %s134
    %p138 = pneg %p132
    %p139 = scmp.eq.s32.totalorder %s9, 1
    %p140 = por %p138, %p139
    %p141 = scmp.ne.s32.totalorder %s133, %s136
    %p142 = scmp.eq.s32.totalorder %s9, 0
    %p143 = por %p141, %p142
    %p144 = scmp.ne.s32.totalorder %s133, %s136
    %p145 = scmp.eq.s32.totalorder %s14, 1
    %p146 = por %p144, %p145
    %p147 = scmp.ne.s32.totalorder %s136, %s137
    %p148 = scmp.eq.s32.totalorder %s14, 0
    %p149 = por %p147, %p148
    %p150 = scmp.ne.s32.totalorder %s136, %s137
    %p151 = scmp.eq.s32.totalorder %s15, 1
    %p152 = por %p150, %p151
    %p154 = scmp.ne.s32.totalorder %s137, %s153
    %p155 = scmp.eq.s32.totalorder %s15, 0
    %p156 = por %p154, %p155
    %p157 = scmp.le.s32.totalorder 1, %s9
    %p158 = scmp.lt.s32.totalorder %s9, 3
    %p159 = pnand %p157, %p158
    %p160 = pneg %p159
    // Predicated region
    $region9: #{tpu_custom_call.1} parent=5 // pred_check
      _
    $region10: #{tpu_custom_call.1} parent=5 // pred_check_branch
      %162 = sbr.rel (%p159) target = $region12
    $region11: #{tpu_custom_call.1} parent=5 // pred_region
      %s163 = ssub.s32 %s9, 1
      // Predicated region
      $region13: #{tpu_custom_call.1} parent=11 // pred_check
        %p164 = pneg %p93
      $region14: #{tpu_custom_call.1} parent=11 // pred_check_branch
        %166 = sbr.rel (%p164) target = $region16
      $region15: #{tpu_custom_call.1} parent=11 // pred_region
        %s167 = smul.u32 2, %s21
        %p168 = scmp.lt.s32.totalorder %s167, 1
        %s169 = scalar_select %p168, %s167, 1
        %p170 = scmp.lt.s32.totalorder %s23, 0
        %s171 = scalar_select %p170, %s23, 0
        %s172 = sadd.s32 %s171, %s169
        %s173 = smul.addr %s172, 8
        %s174 = scalar_lea.vmem %s1, %s173
        %s175 = smul.u32 2, %s21
      $region16: #{tpu_custom_call.1} parent=11 // pred_fallthru
        _
      // Predicated region
      $region17: #{tpu_custom_call.1} parent=11 // pred_check
        %p176 = pneg %p119
      $region18: #{tpu_custom_call.1} parent=11 // pred_check_branch
        %178 = sbr.rel (%p176) target = $region20
      $region19: #{tpu_custom_call.1} parent=11 // pred_region
        %s179 = smul.u32 2, %s21
        %p180 = scmp.lt.s32.totalorder %s179, 1
        %s181 = scalar_select %p180, %s179, 1
        %s182 = smul.addr %s181, 8
        %s183 = scalar_lea.vmem %s2, %s182
        %s184 = smul.u32 2, %s21
      $region20: #{tpu_custom_call.1} parent=11 // pred_fallthru
        _
    $region12: #{tpu_custom_call.1} parent=5 // pred_fallthru
      _
    %p185 = scmp.lt.s32.totalorder %s9, 2
    // Predicated region
    $region21: #{tpu_custom_call.1} parent=5 // pred_check
      %p186 = pneg %p185
    $region22: #{tpu_custom_call.1} parent=5 // pred_check_branch
      %188 = sbr.rel (%p186) target = $region24
    $region23: #{tpu_custom_call.1} parent=5 // pred_region
      // Predicated region
      $region25: #{tpu_custom_call.1} parent=23 // pred_check
        %p189 = pneg %p59
      $region26: #{tpu_custom_call.1} parent=23 // pred_check_branch
        %191 = sbr.rel (%p189) target = $region28
      $region27: #{tpu_custom_call.1} parent=23 // pred_region
        %s192 = smul.u32 2, %s18
        %p193 = scmp.lt.s32.totalorder %s16, 1
        %s194 = scalar_select %p193, %s16, 1
        %p195 = scmp.lt.s32.totalorder %s19, 0
        %s196 = scalar_select %p195, %s19, 0
        %p197 = scmp.lt.s32.totalorder %s192, 1
        %s198 = scalar_select %p197, %s192, 1
        %s199 = smul.addr %s196, 2
        %s200 = sadd.s32 %s198, %s199
        %s201 = smul.addr %s194, 2
        %s202 = sadd.s32 %s200, %s201
        %s203 = smul.addr %s202, 4
        %s204 = scalar_lea.vmem %s0, %s203
        %s205 = smul.u32 2, %s18
      $region28: #{tpu_custom_call.1} parent=23 // pred_fallthru
        _
    $region24: #{tpu_custom_call.1} parent=5 // pred_fallthru
      _
    %p206 = scmp.le.s32.totalorder 1, %s9
    %p207 = scmp.lt.s32.totalorder %s9, 3
    %p208 = pnand %p206, %p207
    %p209 = pneg %p208
    // Predicated region
    $region29: #{tpu_custom_call.1} parent=5 // pred_check
      _
    $region30: #{tpu_custom_call.1} parent=5 // pred_check_branch
      %211 = sbr.rel (%p208) target = $region32
    $region31: #{tpu_custom_call.1} parent=5 // pred_region
      %s212 = ssub.s32 %s9, 1
      %s213 = smul.u32 2, %s22
      %p214 = scmp.lt.s32.totalorder %s20, 1
      %s215 = scalar_select %p214, %s20, 1
      %p216 = scmp.lt.s32.totalorder %s23, 0
      %s217 = scalar_select %p216, %s23, 0
      %p218 = scmp.lt.s32.totalorder %s213, 1
      %s219 = scalar_select %p218, %s213, 1
      %s220 = smul.addr %s217, 2
      %s221 = sadd.s32 %s219, %s220
      %s222 = smul.addr %s215, 2
      %s223 = sadd.s32 %s221, %s222
      %s224 = smul.addr %s223, 4
      %s225 = scalar_lea.vmem %s0, %s224
      %p226 = pneg %p65
      %p227 = pneg %p62
      %s228 = smul.u32 2, %s21
      %p229 = scmp.lt.s32.totalorder %s228, 1
      %s230 = scalar_select %p229, %s228, 1
      %p231 = scmp.lt.s32.totalorder %s23, 0
      %s232 = scalar_select %p231, %s23, 0
      %s233 = sadd.s32 %s232, %s230
      %s234 = smul.addr %s233, 8
      %s235 = scalar_lea.vmem %s1, %s234
      %p236 = pneg %p93
      %p237 = pneg %p90
      %s238 = smul.u32 2, %s21
      %p239 = scmp.lt.s32.totalorder %s238, 1
      %s240 = scalar_select %p239, %s238, 1
      %s241 = smul.addr %s240, 8
      %s242 = scalar_lea.vmem %s2, %s241
      %p243 = pneg %p119
      %p244 = pneg %p116
      %p245 = pneg %p149
      %p246 = pneg %p146
      %s247 = smul.u32 2, %s21
      %s248 = smul.u32 2, %s22
      %p249 = scmp.lt.s32.totalorder %s20, 1
      %s250 = scalar_select %p249, %s20, 1
      %p251 = scmp.lt.s32.totalorder %s247, 1
      %s252 = scalar_select %p251, %s247, 1
      %p253 = scmp.lt.s32.totalorder %s248, 1
      %s254 = scalar_select %p253, %s248, 1
      %s255 = smul.addr %s252, 2
      %s256 = sadd.s32 %s254, %s255
      %s257 = smul.addr %s250, 4
      %s258 = sadd.s32 %s256, %s257
      %s259 = smul.addr %s258, 8
      %s260 = scalar_lea.vmem %s3, %s259
      %s261 = smul.u32 2, %s22
      %p262 = scmp.lt.s32.totalorder %s20, 1
      %s263 = scalar_select %p262, %s20, 1
      %p264 = scmp.lt.s32.totalorder %s23, 0
      %s265 = scalar_select %p264, %s23, 0
      %p266 = scmp.lt.s32.totalorder %s261, 1
      %s267 = scalar_select %p266, %s261, 1
      %s268 = smul.addr %s265, 2
      %s269 = sadd.s32 %s267, %s268
      %s270 = smul.addr %s263, 2
      %s271 = sadd.s32 %s269, %s270
      %s272 = smul.addr %s271, 4
      %s273 = scalar_lea.vmem %s0, %s272
      %s274 = smul.u32 2, %s22
      %s275 = smul.u32 2, %s21
      %p276 = scmp.lt.s32.totalorder %s275, 1
      %s277 = scalar_select %p276, %s275, 1
      %p278 = scmp.lt.s32.totalorder %s23, 0
      %s279 = scalar_select %p278, %s23, 0
      %s280 = sadd.s32 %s279, %s277
      %s281 = smul.addr %s280, 8
      %s282 = scalar_lea.vmem %s1, %s281
      %s283 = smul.u32 2, %s21
      %s284 = smul.u32 2, %s21
      %p285 = scmp.lt.s32.totalorder %s284, 1
      %s286 = scalar_select %p285, %s284, 1
      %s287 = smul.addr %s286, 8
      %s288 = scalar_lea.vmem %s2, %s287
      %s289 = smul.u32 2, %s21
      %s290 = smul.u32 2, %s21
      %s291 = smul.u32 2, %s22
      %p292 = scmp.lt.s32.totalorder %s20, 1
      %s293 = scalar_select %p292, %s20, 1
      %p294 = scmp.lt.s32.totalorder %s290, 1
      %s295 = scalar_select %p294, %s290, 1
      %p296 = scmp.lt.s32.totalorder %s291, 1
      %s297 = scalar_select %p296, %s291, 1
      %s298 = smul.addr %s295, 2
      %s299 = sadd.s32 %s297, %s298
      %s300 = smul.addr %s293, 4
      %s301 = sadd.s32 %s299, %s300
      %s302 = smul.addr %s301, 8
      %s303 = scalar_lea.vmem %s3, %s302
      %s304 = smul.u32 2, %s21
      %s305 = smul.u32 2, %s22
      %p306 = scmp.eq.s32.totalorder %s23, 0
      // Predicated region
      $region33: #{tpu_custom_call.1} parent=31 // pred_check
        %p307 = pneg %p306
      $region34: #{tpu_custom_call.1} parent=31 // pred_check_branch
        %309 = sbr.rel (%p307) target = $region36
      $region35: #{tpu_custom_call.1} parent=31 // pred_region
        %310 = vst [vmem:[#allocation2] sm:$0xff] 0.0
        %311 = vst [vmem:[#allocation2 + $0x8] sm:$0xff] 0.0
        %312 = vst [vmem:[#allocation2 + $0x10] sm:$0x3] 0.0
        %313 = vst [vmem:[#allocation2 + $0x18] sm:$0x3] 0.0
      $region36: #{tpu_custom_call.1} parent=31 // pred_fallthru
        _
      %v314 = vld [vmem:[%s282] sm:$0xff]
      %v315 = vld [vmem:[%s282 + $0x8] sm:$0x3]
      %v316 = vld [vmem:[%s273] sm:$0xff]
      %v317 = vld [vmem:[#allocation2] sm:$0xff]
      %v318 = vld [vmem:[#allocation2 + $0x8] sm:$0xff]
      %v319 = vld [vmem:[#allocation2 + $0x10] sm:$0x3]
      %v320 = vld [vmem:[#allocation2 + $0x18] sm:$0x3]
      %322 = vst [vmem:[#allocation1] ss:$2 sm:$0xff] %v316
      %v323 = vld.sshfl [vmem:[#allocation1] sm:$0xff pattern:$0x75316420]
      %v324 = vld.sshfl [vmem:[#allocation1 + $0x8] sm:$0xff pattern:$0x75316420]
      %vm325 = vcmask 31744
      %v327 = vsel %vm325, %v314, 0
      %v330 = vsel %vm325, %v315, 0
      %vm332 = vcmask 1043456
      %v333 = vsel %vm332, %v323, 0
      %v335 = vsel %vm332, %v324, 0
      %337 = vmatpush.msra.mxu0 0.0
      %338 = vmatpush.msra.mxu0 0.0
      %339 = vmatpush.msra.mxu0 0.0
      %340 = vmatpush.msra.mxu0 0.0
      %341 = vmatpush.msra.mxu0 0.0
      %342 = vmatpush.msra.mxu0 0.0
      %343 = vmatpush.msra.mxu0 0.0
      %344 = vmatpush.msra.mxu0 0.0
      %345 = vmatpush.msra.mxu0 0.0
      %346 = vmatpush.msra.mxu0 0.0
      %347 = vmatpush.msra.mxu0 0.0
      %348 = vmatpush.msra.mxu0 0.0
      %349 = vmatpush.msra.mxu0 0.0
      %350 = vmatpush.msra.mxu0 0.0
      %351 = vmatpush.msra.mxu0 0.0
      %352 = vmatpush.msra.mxu0 %v333
      %353 = vmatmul.f32.gmra.mxu0 %v327
      %v354 = vpop.f32.mrf.mxu0
      %v355 = vadd.f32 0.0, %v354
      %356 = vmatmul.f32.gmra.mxu0 %v330
      %v357 = vpop.f32.mrf.mxu0
      %v358 = vadd.f32 0.0, %v357
      %359 = vdwg.mxu0
      %360 = vmatpush.msra.mxu0 0.0
      %361 = vmatpush.msra.mxu0 0.0
      %362 = vmatpush.msra.mxu0 0.0
      %363 = vmatpush.msra.mxu0 0.0
      %364 = vmatpush.msra.mxu0 0.0
      %365 = vmatpush.msra.mxu0 0.0
      %366 = vmatpush.msra.mxu0 0.0
      %367 = vmatpush.msra.mxu0 0.0
      %368 = vmatpush.msra.mxu0 0.0
      %369 = vmatpush.msra.mxu0 0.0
      %370 = vmatpush.msra.mxu0 0.0
      %371 = vmatpush.msra.mxu0 0.0
      %372 = vmatpush.msra.mxu0 0.0
      %373 = vmatpush.msra.mxu0 0.0
      %374 = vmatpush.msra.mxu0 0.0
      %375 = vmatpush.msra.mxu0 %v335
      %376 = vmatmul.f32.gmra.mxu0 %v327
      %v377 = vpop.f32.mrf.mxu0
      %v378 = vadd.f32 0.0, %v377
      %379 = vmatmul.f32.gmra.mxu0 %v330
      %v380 = vpop.f32.mrf.mxu0
      %v381 = vadd.f32 0.0, %v380
      %382 = vdwg.mxu0
      %v383 = vadd.f32 %v317, %v355
      %v384 = vadd.f32 %v318, %v378
      %v385 = vadd.f32 %v319, %v358
      %v386 = vadd.f32 %v320, %v381
      %387 = vst [vmem:[#allocation2] sm:$0xff] %v383
      %388 = vst [vmem:[#allocation2 + $0x8] sm:$0xff] %v384
      %389 = vst [vmem:[#allocation2 + $0x10] sm:$0x3] %v385
      %390 = vst [vmem:[#allocation2 + $0x18] sm:$0x3] %v386
      // Predicated region
      $region37: #{tpu_custom_call.1} parent=31 // pred_check
        %p391 = pneg %p306
      $region38: #{tpu_custom_call.1} parent=31 // pred_check_branch
        %393 = sbr.rel (%p391) target = $region40
      $region39: #{tpu_custom_call.1} parent=31 // pred_region
        %v394 = vld [vmem:[%s288] sm:$0xff]
        %v395 = vld [vmem:[%s288 + $0x8] sm:$0x3]
        %v396 = vld [vmem:[#allocation2] sm:$0xff]
        %v397 = vld [vmem:[#allocation2 + $0x8] sm:$0xff]
        %v398 = vld [vmem:[#allocation2 + $0x10] sm:$0x3]
        %v399 = vld [vmem:[#allocation2 + $0x18] sm:$0x3]
        %401 = vset.pattern.permute.xlu0 0
        %402 = vperm.xlu0 %401, %v394
        %v403 = vpop.permute.xlu0 %402
        %406 = vset.pattern.permute.xlu0 0
        %407 = vperm.xlu0 %406, %v395
        %v408 = vpop.permute.xlu0 %407
        %v410 = vadd.f32 %v396, %v403
        %v411 = vadd.f32 %v397, %v403
        %v412 = vadd.f32 %v398, %v408
        %v413 = vadd.f32 %v399, %v408
        %414 = vst [vmem:[%s303] sm:$0xff] %v410
        %415 = vst [vmem:[%s303 + $0x8] sm:$0xff] %v411
        %416 = vst [vmem:[%s303 + $0x10] sm:$0x3] %v412
        %417 = vst [vmem:[%s303 + $0x18] sm:$0x3] %v413
      $region40: #{tpu_custom_call.1} parent=31 // pred_fallthru
        _
      %s418 = smul.u32 2, %s21
      %s419 = smul.u32 2, %s22
      %p420 = scmp.lt.s32.totalorder %s20, 1
      %s421 = scalar_select %p420, %s20, 1
      %p422 = scmp.lt.s32.totalorder %s418, 1
      %s423 = scalar_select %p422, %s418, 1
      %p424 = scmp.lt.s32.totalorder %s419, 1
      %s425 = scalar_select %p424, %s419, 1
      %s426 = smul.addr %s423, 2
      %s427 = sadd.s32 %s425, %s426
      %s428 = smul.addr %s421, 4
      %s429 = sadd.s32 %s427, %s428
      %s430 = smul.addr %s429, 8
      %s431 = scalar_lea.vmem %s3, %s430
      // Predicated region
      $region41: #{tpu_custom_call.1} parent=31 // pred_check
        %p432 = pneg %p146
      $region42: #{tpu_custom_call.1} parent=31 // pred_check_branch
        %434 = sbr.rel (%p432) target = $region44
      $region43: #{tpu_custom_call.1} parent=31 // pred_region
        %s435 = smul.u32 2, %s21
        %s436 = smul.u32 2, %s22
      $region44: #{tpu_custom_call.1} parent=31 // pred_fallthru
        _
    $region32: #{tpu_custom_call.1} parent=5 // pred_fallthru
      _
    %p437 = scmp.le.s32.totalorder 2, %s9
    // Predicated region
    $region45: #{tpu_custom_call.1} parent=5 // pred_check
      %p438 = pneg %p437
    $region46: #{tpu_custom_call.1} parent=5 // pred_check_branch
      %440 = sbr.rel (%p438) target = $region48
    $region47: #{tpu_custom_call.1} parent=5 // pred_region
      %s441 = ssub.s32 %s9, 2
      // Predicated region
      $region49: #{tpu_custom_call.1} parent=47 // pred_check
        %p442 = pneg %p152
      $region50: #{tpu_custom_call.1} parent=47 // pred_check_branch
        %444 = sbr.rel (%p442) target = $region52
      $region51: #{tpu_custom_call.1} parent=47 // pred_region
        %s445 = smul.u32 2, %s25
        %s446 = smul.u32 2, %s26
        %p447 = scmp.lt.s32.totalorder %s24, 1
        %s448 = scalar_select %p447, %s24, 1
        %p449 = scmp.lt.s32.totalorder %s445, 1
        %s450 = scalar_select %p449, %s445, 1
        %p451 = scmp.lt.s32.totalorder %s446, 1
        %s452 = scalar_select %p451, %s446, 1
        %s453 = smul.addr %s450, 2
        %s454 = sadd.s32 %s452, %s453
        %s455 = smul.addr %s448, 4
        %s456 = sadd.s32 %s454, %s455
        %s457 = smul.addr %s456, 8
        %s458 = scalar_lea.vmem %s3, %s457
      $region52: #{tpu_custom_call.1} parent=47 // pred_fallthru
        _
    $region48: #{tpu_custom_call.1} parent=5 // pred_fallthru
      _
  $region6: #{tpu_custom_call.1} parent=0 // loop_footer
    %s13 = sadd.s32 1, %s9
  $region7: #{tpu_custom_call.1} parent=0 // loop_footer_branch
    %8 = sbr.rel target = $region3
  $region8: #{tpu_custom_call.1} parent=0 // loop_exit
    _

</llo_original>
